<compile_context>
chip_gen: v7x
topology: tpu7x:2x2x1
jax: 0.10.0
libtpu: 0.0.40
codegen_flags: <defaults>
</compile_context>

<pallas_src>
import jax
import jax.numpy as jnp
from jax import lax
from jax.experimental import pallas as pl
from jax.experimental.pallas import tpu as pltpu


_NEG_BIG = jnp.float32(-1e30)  # bias for padded (fake) classes


def _round_up(n, m):
    return ((n + m - 1) // m) * m


def _resnet_feat_kernel(x_ref, w_ref, b_ref, fh_ref, ph_ref, yh_ref, pt_ref):
    # x tile arrives f32 (single 4 B/elt HBM read); cast to bf16 in VMEM just
    # before the MXU op instead of a separate wrapper-side astype pass.
    x = x_ref[...].astype(jnp.bfloat16)                        # [TB, D] bf16
    w = w_ref[...]                                             # [Cp, D] bf16 (VMEM-resident)
    b = b_ref[...]                                             # [1, Cp] f32

    # logits = x @ W^T + b : contract dim 1 of both operands (MXU handles the
    # transposed-B operand natively; no HBM/VMEM transpose), f32 accumulation.
    # TODO(synk): on v5e confirm via pl.lower_as_mlir that this contraction
    # does not insert per-tile vxpose of the weight; if it does, pre-transpose
    # the cached weight once in prepare_fc_params and contract on rhs dim 0.
    logits = lax.dot_general(
        x, w,
        dimension_numbers=(((1,), (1,)), ((), ())),
        preferred_element_type=jnp.float32,
    ) + b                                                      # [TB, Cp] f32
    fh_ref[...] = logits

    # Numerically-stable softmax along the lane axis (all f32). Padded classes
    # carry a -1e30 bias -> exp() == 0 and they never win max/argmax.
    m = jnp.max(logits, axis=-1, keepdims=True)                # [TB, 1]
    e = jnp.exp(logits - m)                                    # [TB, Cp]
    s = jnp.sum(e, axis=-1, keepdims=True)                     # [TB, 1]
    inv_s = pl.reciprocal(s, approx=True)                      # EUP vrcp slot
    ph_ref[...] = e * inv_s

    # argmax(-1): first index achieving the row max (matches torch argmax).
    cp = logits.shape[-1]
    ids = lax.broadcasted_iota(jnp.int32, logits.shape, 1)     # [TB, Cp]
    yh_ref[...] = jnp.min(jnp.where(logits == m, ids, jnp.int32(cp)),
                          axis=-1, keepdims=True).astype(jnp.int32)

    # max(softmax) = exp(m - m) * inv_s = inv_s  -> no extra reduction.
    # TODO(synk): yh/pt are single-lane stores (vst.msk); pack lane-dense if
    # the head ever becomes latency-critical (low priority vs [B,C] outputs).
    pt_ref[...] = inv_s


def prepare_fc_params(weight, bias):
    """One-time fc-parameter prep. Cache the result and reuse across calls.

    weight: [C, D] f32 (PyTorch Linear layout), bias: [C] f32.
    Returns (w_pad [C_pad, D] bf16, b_pad [1, C_pad] f32) with C padded up to
    a multiple of 128 (zero weight rows, -1e30 bias for padded classes).
    """
    C, D = weight.shape
    C_pad = _round_up(C, 128)
    w_pad = jnp.zeros((C_pad, D), jnp.bfloat16).at[:C].set(
        weight.astype(jnp.bfloat16))
    b_pad = jnp.full((1, C_pad), _NEG_BIG, dtype=jnp.float32).at[0, :C].set(
        bias.astype(jnp.float32))
    return w_pad, b_pad


def resnet_feat_forward(x, w_pad, b_pad, num_classes):
    """x: [B, D] f32; (w_pad, b_pad) from prepare_fc_params; num_classes = C."""
    B, D = x.shape
    C_pad = w_pad.shape[0]
    C = num_classes

    # Batch tiling: 256 rows per step at real sizes (matches the 256-row MXU
    # on v6e/v7x and keeps the double-buffered working set well under v7x's
    # 32 MiB scoped VMEM default); smaller multiple-of-8 tile for tiny batches.
    B8 = _round_up(B, 8)
    TB = min(256, B8)
    B_pad = _round_up(B8, TB)
    x_pad = x if B_pad == B else jnp.zeros((B_pad, D), x.dtype).at[:B].set(x)

    grid = (B_pad // TB,)

    cost = pl.CostEstimate(
        flops=2 * B_pad * D * C_pad,
        transcendentals=B_pad * C_pad,
        bytes_accessed=(B_pad * D * 4            # x (f32 read)
                        + C_pad * D * 2          # weight (bf16, read once)
                        + C_pad * 4              # bias
                        + 2 * B_pad * C_pad * 4  # fh + ph writeback
                        + 2 * B_pad * 4),        # yh + pt
    )

    fh, ph, yh, pt = pl.pallas_call(
        _resnet_feat_kernel,
        grid=grid,
        in_specs=[
            pl.BlockSpec((TB, D), lambda i: (i, 0)),       # x tile (f32)
            pl.BlockSpec((C_pad, D), lambda i: (0, 0)),    # weight: DMA once, stays resident
            pl.BlockSpec((1, C_pad), lambda i: (0, 0)),    # bias: resident
        ],
        out_specs=(
            pl.BlockSpec((TB, C_pad), lambda i: (i, 0)),   # fh
            pl.BlockSpec((TB, C_pad), lambda i: (i, 0)),   # ph
            pl.BlockSpec((TB, 1), lambda i: (i, 0)),       # yh_top
            pl.BlockSpec((TB, 1), lambda i: (i, 0)),       # ph_top
        ),
        out_shape=(
            jax.ShapeDtypeStruct((B_pad, C_pad), jnp.float32),
            jax.ShapeDtypeStruct((B_pad, C_pad), jnp.float32),
            jax.ShapeDtypeStruct((B_pad, 1), jnp.int32),
            jax.ShapeDtypeStruct((B_pad, 1), jnp.float32),
        ),
        compiler_params=pltpu.CompilerParams(
            dimension_semantics=("parallel",)),            # megacore on v7x
        cost_estimate=cost,
    )(x_pad, w_pad, b_pad)

    # TODO(synk): on mem-bound v6e/v7x, store ph (or fh) as bf16 or drop the
    # one the consumer doesn't need to cut the dominant [B, C] writeback;
    # kept f32+both here to match the module's output contract exactly.
    return {
        "fh": fh[:B, :C],
        "ph": ph[:B, :C],
        "yh_top": yh[:B, 0],
        "ph_top": pt[:B, 0],
        "feat": x,
    }


if __name__ == "__main__":
    # Small deterministic problem consistent with the module's fc head; C=120
    # and B=10 deliberately exercise the class-padding (120->128) and batch-
    # padding (10->16) paths.  (Do NOT tune perf at this shape.)
    B, D, C = 10, 256, 120

    key = jax.random.PRNGKey(0)
    kx, kw, kb = jax.random.split(key, 3)
    x = jax.random.normal(kx, (B, D), dtype=jnp.float32)
    weight = jax.random.normal(kw, (C, D), dtype=jnp.float32) * 0.02
    bias = jax.random.normal(kb, (C,), dtype=jnp.float32) * 0.01

    w_pad, b_pad = prepare_fc_params(weight, bias)   # cast/pad once, reuse
    out = resnet_feat_forward(x, w_pad, b_pad, num_classes=C)
    jax.block_until_ready(out)

    # Reference with the same bf16-operand / f32-accumulate matmul semantics.
    logits_ref = jnp.dot(x.astype(jnp.bfloat16), weight.astype(jnp.bfloat16).T,
                         preferred_element_type=jnp.float32) + bias
    ph_ref = jax.nn.softmax(logits_ref, axis=-1)

    assert out["fh"].shape == (B, C) and out["ph"].shape == (B, C)
    assert out["yh_top"].shape == (B,) and out["ph_top"].shape == (B,)
    assert jnp.allclose(out["fh"], logits_ref, atol=2e-3, rtol=2e-3)
    assert jnp.allclose(out["ph"], ph_ref, atol=5e-3, rtol=5e-3)
    assert jnp.array_equal(out["yh_top"],
                           jnp.argmax(logits_ref, axis=-1).astype(jnp.int32))
    assert jnp.allclose(out["ph_top"], jnp.max(ph_ref, axis=-1),
                        atol=5e-3, rtol=5e-3)
    assert jnp.array_equal(out["feat"], x)

    # Pure-f32 sanity check at a looser tolerance (bf16 operand rounding).
    logits_f32 = x @ weight.T + bias
    assert jnp.allclose(out["fh"], logits_f32, atol=5e-2, rtol=5e-2)

    print("KERNEL_OK")
</pallas_src>

<mosaic_0001>
module attributes {stable_mosaic.version = 11 : i64} {
  func.func @_resnet_feat_kernel(%arg0: i32, %arg1: memref<16x256xf32, #tpu.memory_space<vmem>>, %arg2: memref<128x256xbf16, #tpu.memory_space<vmem>>, %arg3: memref<1x128xf32, #tpu.memory_space<vmem>>, %arg4: memref<16x128xf32, #tpu.memory_space<vmem>>, %arg5: memref<16x128xf32, #tpu.memory_space<vmem>>, %arg6: memref<16x1xi32, #tpu.memory_space<vmem>>, %arg7: memref<16x1xf32, #tpu.memory_space<vmem>>) attributes {dimension_semantics = [#tpu.dimension_semantics<parallel>], iteration_bounds = array<i64: 1>, scalar_prefetch = 0 : i64, scratch_operands = 0 : i64, tpu.core_type = #tpu.core_type<tc>, window_params = [{transform_indices = @transform_0, window_bounds = array<i64: 16, 256>}, {pipeline_mode = #tpu.pipeline_mode<synchronous>, transform_indices = @transform_1, window_bounds = array<i64: 128, 256>}, {pipeline_mode = #tpu.pipeline_mode<synchronous>, transform_indices = @transform_2, window_bounds = array<i64: 1, 128>}, {transform_indices = @transform_3, window_bounds = array<i64: 16, 128>}, {transform_indices = @transform_4, window_bounds = array<i64: 16, 128>}, {transform_indices = @transform_5, window_bounds = array<i64: 16, 1>}, {transform_indices = @transform_6, window_bounds = array<i64: 16, 1>}]} {
    %c0 = arith.constant 0 : index
    %c0_0 = arith.constant 0 : index
    %0 = vector.load %arg1[%c0, %c0_0] : memref<16x256xf32, #tpu.memory_space<vmem>>, vector<16x256xf32>
    %1 = arith.truncf %0 : vector<16x256xf32> to vector<16x256xbf16>
    %c0_1 = arith.constant 0 : index
    %c0_2 = arith.constant 0 : index
    %2 = vector.load %arg2[%c0_1, %c0_2] : memref<128x256xbf16, #tpu.memory_space<vmem>>, vector<128x256xbf16>
    %c0_3 = arith.constant 0 : index
    %c0_4 = arith.constant 0 : index
    %3 = vector.load %arg3[%c0_3, %c0_4] : memref<1x128xf32, #tpu.memory_space<vmem>>, vector<1x128xf32>
    %cst = arith.constant dense<0.000000e+00> : vector<16x128xf32>
    %4 = tpu.matmul %1, %2, %cst {dimension_numbers = #tpu.dot_dimension_numbers<[1], [1], [0], [0], [0, 0, 1, 0], [], []>} : vector<16x256xbf16>, vector<128x256xbf16>, vector<16x128xf32> -> vector<16x128xf32>
    %5 = vector.broadcast %3 : vector<1x128xf32> to vector<16x128xf32>
    %6 = arith.addf %4, %5 : vector<16x128xf32>
    %c0_5 = arith.constant 0 : index
    %c0_6 = arith.constant 0 : index
    %7 = vector.load %arg4[%c0_5, %c0_6] : memref<16x128xf32, #tpu.memory_space<vmem>>, vector<16x128xf32>
    tpu.vector_store %arg4[%c0_5, %c0_6], %6 {strides = array<i32>} : memref<16x128xf32, #tpu.memory_space<vmem>>, vector<16x128xf32>,
    %cst_7 = arith.constant dense<0xFF800000> : vector<16xf32>
    %8 = vector.multi_reduction <maximumf>, %6, %cst_7 [1] : vector<16x128xf32> to vector<16xf32>
    %9 = vector.shape_cast %8 : vector<16xf32> to vector<16x1xf32>
    %10 = vector.broadcast %9 : vector<16x1xf32> to vector<16x128xf32>
    %11 = arith.subf %6, %10 : vector<16x128xf32>
    %12 = math.exp %11 : vector<16x128xf32>
    %cst_8 = arith.constant dense<0.000000e+00> : vector<16xf32>
    %13 = vector.multi_reduction <add>, %12, %cst_8 [1] : vector<16x128xf32> to vector<16xf32>
    %14 = vector.shape_cast %13 : vector<16xf32> to vector<16x1xf32>
    %15 = tpu.reciprocal %14 {approx = true} : vector<16x1xf32> -> vector<16x1xf32>
    %16 = vector.broadcast %15 : vector<16x1xf32> to vector<16x128xf32>
    %17 = arith.mulf %12, %16 : vector<16x128xf32>
    %c0_9 = arith.constant 0 : index
    %c0_10 = arith.constant 0 : index
    %18 = vector.load %arg5[%c0_9, %c0_10] : memref<16x128xf32, #tpu.memory_space<vmem>>, vector<16x128xf32>
    tpu.vector_store %arg5[%c0_9, %c0_10], %17 {strides = array<i32>} : memref<16x128xf32, #tpu.memory_space<vmem>>, vector<16x128xf32>,
    %19 = tpu.iota {dimensions = array<i32: 1>} : vector<16x128xi32>
    %20 = vector.broadcast %9 : vector<16x1xf32> to vector<16x128xf32>
    %21 = arith.cmpf oeq, %6, %20 : vector<16x128xf32>
    %c128_i32 = arith.constant 128 : i32
    %22 = vector.broadcast %c128_i32 : i32 to vector<16x128xi32>
    %23 = arith.select %21, %19, %22 : vector<16x128xi1>, vector<16x128xi32>
    %cst_11 = arith.constant dense<2147483647> : vector<16xi32>
    %24 = vector.multi_reduction <minsi>, %23, %cst_11 [1] : vector<16x128xi32> to vector<16xi32>
    %25 = vector.shape_cast %24 : vector<16xi32> to vector<16x1xi32>
    %c0_12 = arith.constant 0 : index
    %c0_13 = arith.constant 0 : index
    %26 = vector.load %arg6[%c0_12, %c0_13] : memref<16x1xi32, #tpu.memory_space<vmem>>, vector<16x1xi32>
    tpu.vector_store %arg6[%c0_12, %c0_13], %25 {strides = array<i32>} : memref<16x1xi32, #tpu.memory_space<vmem>>, vector<16x1xi32>,
    %c0_14 = arith.constant 0 : index
    %c0_15 = arith.constant 0 : index
    %27 = vector.load %arg7[%c0_14, %c0_15] : memref<16x1xf32, #tpu.memory_space<vmem>>, vector<16x1xf32>
    tpu.vector_store %arg7[%c0_14, %c0_15], %15 {strides = array<i32>} : memref<16x1xf32, #tpu.memory_space<vmem>>, vector<16x1xf32>,
    return
  }
  func.func @transform_0(%arg0: i32) -> (i32, i32) {
    %c0_i32 = arith.constant 0 : i32
    %c0_i32_0 = arith.constant 0 : i32
    return %arg0, %c0_i32 : i32, i32
  }
  func.func @transform_1(%arg0: i32) -> (i32, i32) {
    %c0_i32 = arith.constant 0 : i32
    %c0_i32_0 = arith.constant 0 : i32
    %c0_i32_1 = arith.constant 0 : i32
    return %c0_i32, %c0_i32_0 : i32, i32
  }
  func.func @transform_2(%arg0: i32) -> (i32, i32) {
    %c0_i32 = arith.constant 0 : i32
    %c0_i32_0 = arith.constant 0 : i32
    %c0_i32_1 = arith.constant 0 : i32
    return %c0_i32, %c0_i32_0 : i32, i32
  }
  func.func @transform_3(%arg0: i32) -> (i32, i32) {
    %c0_i32 = arith.constant 0 : i32
    %c0_i32_0 = arith.constant 0 : i32
    return %arg0, %c0_i32 : i32, i32
  }
  func.func @transform_4(%arg0: i32) -> (i32, i32) {
    %c0_i32 = arith.constant 0 : i32
    %c0_i32_0 = arith.constant 0 : i32
    return %arg0, %c0_i32 : i32, i32
  }
  func.func @transform_5(%arg0: i32) -> (i32, i32) {
    %c0_i32 = arith.constant 0 : i32
    %c0_i32_0 = arith.constant 0 : i32
    return %arg0, %c0_i32 : i32, i32
  }
  func.func @transform_6(%arg0: i32) -> (i32, i32) {
    %c0_i32 = arith.constant 0 : i32
    %c0_i32_0 = arith.constant 0 : i32
    return %arg0, %c0_i32 : i32, i32
  }
}

</mosaic_0001>

<llo_original>
// kernel: tpu_custom_call.1
$region0: #{tpu_custom_call.1}
  #allocation0 [shape = 'u32[]', space=smem, size = 0x4, offset = 0x4, fixed_abs, tag = 'smem constant byte address 0x4 - core index']
  #allocation1 [shape = 'u32[144,128]{1,0:T(1,128)}', space=vmem, size = 0x12000, scoped, tag = 'internal scratch']
  %s0 = inlined_call_operand.hbm [shape: f32[16,256], index: 0, kind: input, shape index: {}]
  %s1 = inlined_call_operand.hbm [shape: bf16[128,256], index: 1, kind: input, shape index: {}]
  %s2 = inlined_call_operand.vmem [shape: f32[1,128], index: 2, kind: input, shape index: {}]
  %s3 = inlined_call_operand.hbm [shape: f32[16,128], index: 3, kind: output, shape index: {0}]
  %s4 = inlined_call_operand.hbm [shape: f32[16,128], index: 4, kind: output, shape index: {1}]
  %s5 = inlined_call_operand.vmem [shape: s32[16,1], index: 5, kind: output, shape index: {2}]
  %s6 = inlined_call_operand.vmem [shape: f32[16,1], index: 6, kind: output, shape index: {3}]
  %7 = xla_tuple %s3, %s4, %s5, %s6
  %s8 = sld [smem:[#allocation0]]
  $region54: #{tpu_custom_call.1} parent=0
    _
  %s10 = ssub.s32 1, %s8
  %s11 = scalar_select 0, %s10, %s8
  $region1: #{tpu_custom_call.1} parent=0
    #allocation2 [shape = 'u8[16384]{0}', space=vmem, size = 0x4000, scoped, tag = 'input window, operand 0, single buffered']
    #allocation3 [shape = 's32[1]{0}', space=sflag, size = 0x4, scoped, tag = 'scoped memory for tpu_custom_call.1']
    #allocation4 [shape = 's32[1]{0}', space=sflag, size = 0x4, scoped, tag = 'scoped memory for tpu_custom_call.1']
    #allocation5 [shape = 'u8[65536]{0}', space=vmem, size = 0x10000, scoped, tag = 'input window, operand 1, single buffered']
    #allocation6 [shape = 's32[1]{0}', space=sflag, size = 0x4, scoped, tag = 'scoped memory for tpu_custom_call.1']
    #allocation7 [shape = 'u8[8192]{0}', space=vmem, size = 0x2000, scoped, tag = 'output window, operand 0, single buffered']
    #allocation8 [shape = 'u8[8192]{0}', space=vmem, size = 0x2000, scoped, tag = 'output window, operand 1, single buffered']
    #allocation9 [shape = 's32[1]{0}', space=sflag, size = 0x4, scoped, tag = 'scoped memory for tpu_custom_call.1']
    %12 = vsyncpa [#allocation3], 0
    %13 = vsyncpa [#allocation6], 0
    %14 = vsyncpa [#allocation4], 0
    %15 = vsyncpa [#allocation9], 0
    // Predicated region
    $region2: #{tpu_custom_call.1} parent=1 // pred_check
      _
    $region3: #{tpu_custom_call.1} parent=1 // pred_check_branch
      %17 = sbr.rel (0) target = $region5
    $region4: #{tpu_custom_call.1} parent=1 // pred_region
      %s19 = ssub.s32 512, 512
      %20 = vsyncadd [#allocation3], %s19
      %s21 = sshll.u32 [#allocation2], 4
      %s22 = int_to_ptr.vmem [resolvable:$true] %s21
      %27 = dma.hbm_to_vmem [thread:$0]  %s0, 512, %s22, [#allocation3], 256, 256, 16
    $region5: #{tpu_custom_call.1} parent=1 // pred_fallthru
      _
    // Predicated region
    $region6: #{tpu_custom_call.1} parent=1 // pred_check
      _
    $region7: #{tpu_custom_call.1} parent=1 // pred_check_branch
      %29 = sbr.rel (0) target = $region9
    $region8: #{tpu_custom_call.1} parent=1 // pred_region
      %s31 = ssub.s32 2048, 2048
      %32 = vsyncadd [#allocation6], %s31
      %s33 = sshll.u32 [#allocation5], 4
      %s34 = int_to_ptr.vmem [resolvable:$true] %s33
      %39 = dma.hbm_to_vmem [thread:$0]  %s1, 2048, %s34, [#allocation6], 128, 128, 8
    $region9: #{tpu_custom_call.1} parent=1 // pred_fallthru
      _
    // Predicated region
    $region10: #{tpu_custom_call.1} parent=1 // pred_check
      _
    $region11: #{tpu_custom_call.1} parent=1 // pred_check_branch
      %41 = sbr.rel (0) target = $region13
    $region12: #{tpu_custom_call.1} parent=1 // pred_region
      _
    $region13: #{tpu_custom_call.1} parent=1 // pred_fallthru
      _
    // Predicated region
    $region14: #{tpu_custom_call.1} parent=1 // pred_check
      _
    $region15: #{tpu_custom_call.1} parent=1 // pred_check_branch
      %43 = sbr.rel (0) target = $region17
    $region16: #{tpu_custom_call.1} parent=1 // pred_region
      %44 = dma.done [#allocation3], 512
    $region17: #{tpu_custom_call.1} parent=1 // pred_fallthru
      _
    // Predicated region
    $region18: #{tpu_custom_call.1} parent=1 // pred_check
      _
    $region19: #{tpu_custom_call.1} parent=1 // pred_check_branch
      %46 = sbr.rel (0) target = $region21
    $region20: #{tpu_custom_call.1} parent=1 // pred_region
      %47 = dma.done [#allocation6], 2048
    $region21: #{tpu_custom_call.1} parent=1 // pred_fallthru
      _
    %v49 = vld [vmem:[#allocation2] sm:$0xff]
    %v50 = vld [vmem:[#allocation2 + $0x8] sm:$0xff]
    %v51 = vld [vmem:[#allocation2 + $0x10] sm:$0xff]
    %v52 = vld [vmem:[#allocation2 + $0x18] sm:$0xff]
    %v53 = vpack.c.bf16 %v51, %v49
    %v54 = vpack.c.bf16 %v52, %v50
    %v55 = vld [vmem:[#allocation5] sm:$0xff]
    %v56 = vld [vmem:[#allocation5 + $0x8] sm:$0xff]
    %v57 = vld [vmem:[#allocation5 + $0x10] sm:$0xff]
    %v58 = vld [vmem:[#allocation5 + $0x18] sm:$0xff]
    %v59 = vld [vmem:[#allocation5 + $0x20] sm:$0xff]
    %v60 = vld [vmem:[#allocation5 + $0x28] sm:$0xff]
    %v61 = vld [vmem:[#allocation5 + $0x30] sm:$0xff]
    %v62 = vld [vmem:[#allocation5 + $0x38] sm:$0xff]
    %v63 = vld [vmem:[#allocation5 + $0x40] sm:$0xff]
    %v64 = vld [vmem:[#allocation5 + $0x48] sm:$0xff]
    %v65 = vld [vmem:[#allocation5 + $0x50] sm:$0xff]
    %v66 = vld [vmem:[#allocation5 + $0x58] sm:$0xff]
    %v67 = vld [vmem:[#allocation5 + $0x60] sm:$0xff]
    %v68 = vld [vmem:[#allocation5 + $0x68] sm:$0xff]
    %v69 = vld [vmem:[#allocation5 + $0x70] sm:$0xff]
    %v70 = vld [vmem:[#allocation5 + $0x78] sm:$0xff]
    %v71 = vld [vmem:[%s2] sm:$0x1]
    %v73 = vlaneseq
    %v74 = vshrl.u32 %v73, 7
    %v75 = vsub.s32 0, %v74
    %v76 = vrot.slane %v71, %v75
    %v94 = vunpack.c.l.b16 %v55
    %v95 = vunpack.c.h.b16 %v55
    %v96 = vunpack.c.l.b16 %v56
    %v97 = vunpack.c.h.b16 %v56
    %v98 = vunpack.c.l.b16 %v57
    %v99 = vunpack.c.h.b16 %v57
    %v100 = vunpack.c.l.b16 %v58
    %v101 = vunpack.c.h.b16 %v58
    %v102 = vunpack.c.l.b16 %v59
    %v103 = vunpack.c.h.b16 %v59
    %v104 = vunpack.c.l.b16 %v60
    %v105 = vunpack.c.h.b16 %v60
    %v106 = vunpack.c.l.b16 %v61
    %v107 = vunpack.c.h.b16 %v61
    %v108 = vunpack.c.l.b16 %v62
    %v109 = vunpack.c.h.b16 %v62
    %v110 = vunpack.c.l.b16 %v63
    %v111 = vunpack.c.h.b16 %v63
    %v112 = vunpack.c.l.b16 %v64
    %v113 = vunpack.c.h.b16 %v64
    %v114 = vunpack.c.l.b16 %v65
    %v115 = vunpack.c.h.b16 %v65
    %v116 = vunpack.c.l.b16 %v66
    %v117 = vunpack.c.h.b16 %v66
    %v118 = vunpack.c.l.b16 %v67
    %v119 = vunpack.c.h.b16 %v67
    %v120 = vunpack.c.l.b16 %v68
    %v121 = vunpack.c.h.b16 %v68
    %v122 = vunpack.c.l.b16 %v69
    %v123 = vunpack.c.h.b16 %v69
    %v124 = vunpack.c.l.b16 %v70
    %v125 = vunpack.c.h.b16 %v70
    %v126 = vpack.c.b16 %v96, %v94
    %v127 = vpack.c.b16 %v97, %v95
    %v128 = vpack.c.b16 %v100, %v98
    %v129 = vpack.c.b16 %v101, %v99
    %v130 = vpack.c.b16 %v104, %v102
    %v131 = vpack.c.b16 %v105, %v103
    %v132 = vpack.c.b16 %v108, %v106
    %v133 = vpack.c.b16 %v109, %v107
    %v134 = vpack.c.b16 %v112, %v110
    %v135 = vpack.c.b16 %v113, %v111
    %v136 = vpack.c.b16 %v116, %v114
    %v137 = vpack.c.b16 %v117, %v115
    %v138 = vpack.c.b16 %v120, %v118
    %v139 = vpack.c.b16 %v121, %v119
    %v140 = vpack.c.b16 %v124, %v122
    %v141 = vpack.c.b16 %v125, %v123
    %158 = vmatprep.subr.bf16.mxu0 %v127
    %159 = vmatpush1.bf16.xpose.msra.mxu0 %v126
    %160 = vmatprep.subr.bf16.mxu0 %v129
    %161 = vmatpush1.bf16.xpose.msra.mxu0 %v128
    %162 = vmatprep.subr.bf16.mxu0 %v131
    %163 = vmatpush1.bf16.xpose.msra.mxu0 %v130
    %164 = vmatprep.subr.bf16.mxu0 %v133
    %165 = vmatpush1.bf16.xpose.msra.mxu0 %v132
    %166 = vmatprep.subr.bf16.mxu0 %v135
    %167 = vmatpush1.bf16.xpose.msra.mxu0 %v134
    %168 = vmatprep.subr.bf16.mxu0 %v137
    %169 = vmatpush1.bf16.xpose.msra.mxu0 %v136
    %170 = vmatprep.subr.bf16.mxu0 %v139
    %171 = vmatpush1.bf16.xpose.msra.mxu0 %v138
    %172 = vmatprep.subr.bf16.mxu0 %v141
    %173 = vmatpush1.bf16.xpose.msra.mxu0 %v140
    %174 = vmatprep.subr.bf16.mxu0 0
    %175 = vmatpush1.bf16.xpose.msra.mxu0 0
    %176 = vmatprep.subr.bf16.mxu0 0
    %177 = vmatpush1.bf16.xpose.msra.mxu0 0
    %178 = vmatprep.subr.bf16.mxu0 0
    %179 = vmatpush1.bf16.xpose.msra.mxu0 0
    %180 = vmatprep.subr.bf16.mxu0 0
    %181 = vmatpush1.bf16.xpose.msra.mxu0 0
    %182 = vmatprep.subr.bf16.mxu0 0
    %183 = vmatpush1.bf16.xpose.msra.mxu0 0
    %184 = vmatprep.subr.bf16.mxu0 0
    %185 = vmatpush1.bf16.xpose.msra.mxu0 0
    %186 = vmatprep.subr.bf16.mxu0 0
    %187 = vmatpush1.bf16.xpose.msra.mxu0 0
    %188 = vmatprep.subr.bf16.mxu0 0
    %189 = vmatpush1.bf16.xpose.msra.mxu0 0
    %190 = vmatprep.mubr.bf16.mxu0 %v54
    %191 = vmatmul.mubr.bf16.gmra.mrb[0].mxu0 %v53
    %v192 = vpop.f32.mrb[0].mxu0
    %v193 = vadd.f32 %v76, %v192
    %v194 = vpop.f32.mrb[0].mxu0
    %v195 = vpop.f32.mrb[0].mxu0
    %v196 = vadd.f32 %v76, %v195
    %v197 = vpop.f32.mrb[0].mxu0
    %198 = vdwg.mxu0
    %199 = vst [vmem:[#allocation7] sm:$0xff] %v193
    %200 = vst [vmem:[#allocation7 + $0x8] sm:$0xff] %v196
    %201 = vmax.xlane.f32.xlu0 %v193
    %v202 = vpop.xlane.xlu0 %201
    %203 = vmax.xlane.f32.xlu0 %v196
    %v204 = vpop.xlane.xlu0 %203
    %v205 = vsub.f32 %v193, %v202
    %v206 = vsub.f32 %v196, %v204
    %v207 = vmul.f32 %v205, 1.442695
    %v208 = vpow.pop %v207
    %v209 = vmul.f32 %v206, 1.442695
    %v210 = vpow.pop %v209
    %211 = vadd.xlane.f32.xlu0 %v208
    %v212 = vpop.xlane.xlu0 %211
    %213 = vadd.xlane.f32.xlu0 %v210
    %v214 = vpop.xlane.xlu0 %213
    %v215 = vrcp.pop %v212
    %v216 = vrcp.pop %v214
    %v217 = vmul.f32 %v208, %v215
    %v218 = vmul.f32 %v210, %v216
    %219 = vst [vmem:[#allocation8] sm:$0xff] %v217
    %220 = vst [vmem:[#allocation8 + $0x8] sm:$0xff] %v218
    %v221 = vlaneseq
    %v222 = vand.u32 %v221, 127
    %vm223 = vcmp.eq.f32.partialorder %v193, %v202
    %vm224 = vcmp.eq.f32.partialorder %v196, %v204
    %v225 = vsel %vm223, %v222, 128
    %v226 = vsel %vm224, %v222, 128
    %v227 = vand.u32 %v225, 65535
    %v228 = vshra.s32 %v225, 16
    %v229 = vcvt.s32.f32 %v227
    %v230 = vcvt.s32.f32 %v228
    %231 = vmin.xlane.f32.xlu0 %v230
    %v232 = vpop.xlane.xlu0 %231
    %vm233 = vcmp.eq.f32.partialorder %v230, %v232
    %v234 = vsel %vm233, %v229, inf
    %235 = vmin.xlane.f32.xlu0 %v234
    %v236 = vpop.xlane.xlu0 %235
    %v237 = vcvt.f32.s32 %v236
    %v238 = vcvt.f32.s32 %v232
    %v239 = vshll.u32 %v238, 16
    %v240 = vadd.s32 %v239, %v237
    %v241 = vand.u32 %v226, 65535
    %v242 = vshra.s32 %v226, 16
    %v243 = vcvt.s32.f32 %v241
    %v244 = vcvt.s32.f32 %v242
    %245 = vmin.xlane.f32.xlu0 %v244
    %v246 = vpop.xlane.xlu0 %245
    %vm247 = vcmp.eq.f32.partialorder %v244, %v246
    %v248 = vsel %vm247, %v243, inf
    %249 = vmin.xlane.f32.xlu0 %v248
    %v250 = vpop.xlane.xlu0 %249
    %v251 = vcvt.f32.s32 %v250
    %v252 = vcvt.f32.s32 %v246
    %v253 = vshll.u32 %v252, 16
    %v254 = vadd.s32 %v253, %v251
    %vm255 = vcmask 7168
    %256 = vst.msk [vmem:[%s5] sm:$0xff] %vm255, %v240
    %257 = vst.msk [vmem:[%s5 + $0x8] sm:$0xff] %vm255, %v254
    %258 = vst.msk [vmem:[%s6] sm:$0xff] %vm255, %v215
    %259 = vst.msk [vmem:[%s6 + $0x8] sm:$0xff] %vm255, %v216
    // Predicated region
    $region22: #{tpu_custom_call.1} parent=1 // pred_check
      _
    $region23: #{tpu_custom_call.1} parent=1 // pred_check_branch
      %261 = sbr.rel (0) target = $region25
    $region24: #{tpu_custom_call.1} parent=1 // pred_region
      %s263 = ssub.s32 256, 256
      %264 = vsyncadd [#allocation4], %s263
      %s265 = sshll.u32 [#allocation7], 4
      %s266 = int_to_ptr.vmem [resolvable:$true] %s265
      %271 = dma.vmem_to_hbm [thread:$0]  %s266, 256, %s3, [#allocation4], 128, 128, 8
    $region25: #{tpu_custom_call.1} parent=1 // pred_fallthru
      _
    // Predicated region
    $region26: #{tpu_custom_call.1} parent=1 // pred_check
      _
    $region27: #{tpu_custom_call.1} parent=1 // pred_check_branch
      %273 = sbr.rel (0) target = $region29
    $region28: #{tpu_custom_call.1} parent=1 // pred_region
      %s275 = ssub.s32 256, 256
      %276 = vsyncadd [#allocation9], %s275
      %s277 = sshll.u32 [#allocation8], 4
      %s278 = int_to_ptr.vmem [resolvable:$true] %s277
      %283 = dma.vmem_to_hbm [thread:$0]  %s278, 256, %s4, [#allocation9], 128, 128, 8
    $region29: #{tpu_custom_call.1} parent=1 // pred_fallthru
      _
    // Predicated region
    $region30: #{tpu_custom_call.1} parent=1 // pred_check
      _
    $region31: #{tpu_custom_call.1} parent=1 // pred_check_branch
      %285 = sbr.rel (0) target = $region33
    $region32: #{tpu_custom_call.1} parent=1 // pred_region
      _
    $region33: #{tpu_custom_call.1} parent=1 // pred_fallthru
      _
    // Predicated region
    $region34: #{tpu_custom_call.1} parent=1 // pred_check
      _
    $region35: #{tpu_custom_call.1} parent=1 // pred_check_branch
      %287 = sbr.rel (0) target = $region37
    $region36: #{tpu_custom_call.1} parent=1 // pred_region
      _
    $region37: #{tpu_custom_call.1} parent=1 // pred_fallthru
      _
    // Predicated region
    $region38: #{tpu_custom_call.1} parent=1 // pred_check
      _
    $region39: #{tpu_custom_call.1} parent=1 // pred_check_branch
      %289 = sbr.rel (0) target = $region41
    $region40: #{tpu_custom_call.1} parent=1 // pred_region
      %290 = dma.done [#allocation4], 256
    $region41: #{tpu_custom_call.1} parent=1 // pred_fallthru
      _
    // Predicated region
    $region42: #{tpu_custom_call.1} parent=1 // pred_check
      _
    $region43: #{tpu_custom_call.1} parent=1 // pred_check_branch
      %292 = sbr.rel (0) target = $region45
    $region44: #{tpu_custom_call.1} parent=1 // pred_region
      %293 = dma.done [#allocation9], 256
    $region45: #{tpu_custom_call.1} parent=1 // pred_fallthru
      _
    // Predicated region
    $region46: #{tpu_custom_call.1} parent=1 // pred_check
      _
    $region47: #{tpu_custom_call.1} parent=1 // pred_check_branch
      %295 = sbr.rel (0) target = $region49
    $region48: #{tpu_custom_call.1} parent=1 // pred_region
      _
    $region49: #{tpu_custom_call.1} parent=1 // pred_fallthru
      _
    // Predicated region
    $region50: #{tpu_custom_call.1} parent=1 // pred_check
      _
    $region51: #{tpu_custom_call.1} parent=1 // pred_check_branch
      %297 = sbr.rel (0) target = $region53
    $region52: #{tpu_custom_call.1} parent=1 // pred_region
      _
    $region53: #{tpu_custom_call.1} parent=1 // pred_fallthru
      _
    %298 = vsyncpa [#allocation3], 1
    %299 = vsyncpa [#allocation6], 1
    %300 = vsyncpa [#allocation4], 1
    %301 = vsyncpa [#allocation9], 1

</llo_original>
